<compile_context>
chip_gen: v7x
topology: tpu7x:2x2x1
jax: 0.10.0
libtpu: 0.0.40
codegen_flags: <defaults>
</compile_context>

<pallas_src>
import jax
import jax.numpy as jnp
from jax import lax
from jax.experimental import pallas as pl
from jax.experimental.pallas import tpu as pltpu


_COMPUTE_DTYPE = jnp.bfloat16   # native full-rate MXU input dtype on v5e/v6e/v7x
_MXU_K = 256                    # pack [Wx;Wh] into one dot when fan_in <= this


def _round_up(x, m):
    return ((x + m - 1) // m) * m


def _vmem_limit_bytes(block_bytes, headroom=2.0, floor=32 << 20, cap=100 << 20):
    # Every BlockSpec block is (up to) double-buffered by the pipeline.
    need = int(sum(2 * b for b in block_bytes) * headroom)
    return int(min(max(need, floor), cap))


def _pick_batch_block(B, per_row_bytes, resident_bytes, budget=48 << 20):
    # Largest batch tile whose double-buffered streamed blocks + resident
    # weights fit a conservative (v7x-safe) VMEM budget.  No forced split of
    # an exactly-fitting B.
    for bb in (512, 256, 128):
        if B % bb == 0 and resident_bytes + 2 * bb * per_row_bytes <= budget:
            return bb
    return B


# ----------------------------- single-step cell -----------------------------

def _cell_packed_kernel(xh_ref, w_ref, b_ref, out_ref):
    # One MXU dot: z = [x,h] @ [Wx;Wh] + b  (bf16 inputs, f32 accumulate).
    z = jnp.dot(xh_ref[...].astype(_COMPUTE_DTYPE), w_ref[...],
                preferred_element_type=jnp.float32)
    z = z + b_ref[...]
    out_ref[...] = jnp.tanh(z).astype(out_ref.dtype)


def _cell_split_kernel(x_ref, h_ref, wx_ref, wh_ref, b_ref, out_ref):
    # Two accumulating MXU dots for large fan_in (K already fills the MXU).
    z = jnp.dot(x_ref[...].astype(_COMPUTE_DTYPE), wx_ref[...],
                preferred_element_type=jnp.float32)
    z = z + jnp.dot(h_ref[...].astype(_COMPUTE_DTYPE), wh_ref[...],
                    preferred_element_type=jnp.float32)
    z = z + b_ref[...]
    out_ref[...] = jnp.tanh(z).astype(out_ref.dtype)


def rnn_cell(xt, hprev, weight, bias):
    """ht = tanh(cat([xt, hprev], 1) @ weight.T + bias)  (PyTorch Linear convention).

    NOTE: the weight slice/transpose/pad below should be hoisted out of a
    per-timestep loop (or use rnn_cell_sequence, which keeps weights resident).
    """
    B, n_embd = xt.shape
    _, n_embd2 = hprev.shape
    fan_in = n_embd + n_embd2
    Np = _round_up(n_embd2, 128)              # lane-dense output dim
    b2 = jnp.zeros((1, Np), jnp.float32).at[0, :n_embd2].set(bias.astype(jnp.float32))

    if fan_in <= _MXU_K:
        # Packed path: one dot with K = fan_in (wrapper-side concat is free-ish
        # XLA plumbing; avoids two badly under-filled short-K MXU pushes).
        xh = jnp.concatenate([xt, hprev], axis=1)
        w = jnp.zeros((fan_in, Np), _COMPUTE_DTYPE).at[:, :n_embd2].set(
            weight.T.astype(_COMPUTE_DTYPE))

        resident = fan_in * Np * 2 + Np * 4
        per_row = fan_in * 4 + Np * 4          # streamed xh row + out row (f32)
        bb = _pick_batch_block(B, per_row, resident)
        blocks = [bb * fan_in * 4, fan_in * Np * 2, Np * 4, bb * Np * 4]

        out = pl.pallas_call(
            _cell_packed_kernel,
            out_shape=jax.ShapeDtypeStruct((B, Np), xt.dtype),
            grid_spec=pltpu.PrefetchScalarGridSpec(
                num_scalar_prefetch=0,
                grid=(B // bb,),
                in_specs=[
                    pl.BlockSpec((bb, fan_in), lambda i: (i, 0)),
                    pl.BlockSpec((fan_in, Np), lambda i: (0, 0)),   # resident
                    pl.BlockSpec((1, Np), lambda i: (0, 0)),        # resident
                ],
                out_specs=pl.BlockSpec((bb, Np), lambda i: (i, 0)),
            ),
            compiler_params=pltpu.CompilerParams(
                dimension_semantics=("parallel",),
                vmem_limit_bytes=_vmem_limit_bytes(blocks)),
        )(xh, w, b2)
    else:
        # Split path: K dims already fill the MXU, keep x/h separate (no concat copy).
        wx = jnp.zeros((n_embd, Np), _COMPUTE_DTYPE).at[:, :n_embd2].set(
            weight[:, :n_embd].T.astype(_COMPUTE_DTYPE))
        wh = jnp.zeros((n_embd2, Np), _COMPUTE_DTYPE).at[:, :n_embd2].set(
            weight[:, n_embd:].T.astype(_COMPUTE_DTYPE))

        resident = (n_embd + n_embd2) * Np * 2 + Np * 4
        per_row = (n_embd + n_embd2) * 4 + Np * 4
        bb = _pick_batch_block(B, per_row, resident)
        blocks = [bb * n_embd * 4, bb * n_embd2 * 4,
                  n_embd * Np * 2, n_embd2 * Np * 2, Np * 4, bb * Np * 4]

        out = pl.pallas_call(
            _cell_split_kernel,
            out_shape=jax.ShapeDtypeStruct((B, Np), xt.dtype),
            grid_spec=pltpu.PrefetchScalarGridSpec(
                num_scalar_prefetch=0,
                grid=(B // bb,),
                in_specs=[
                    pl.BlockSpec((bb, n_embd), lambda i: (i, 0)),
                    pl.BlockSpec((bb, n_embd2), lambda i: (i, 0)),
                    pl.BlockSpec((n_embd, Np), lambda i: (0, 0)),   # resident
                    pl.BlockSpec((n_embd2, Np), lambda i: (0, 0)),  # resident
                    pl.BlockSpec((1, Np), lambda i: (0, 0)),        # resident
                ],
                out_specs=pl.BlockSpec((bb, Np), lambda i: (i, 0)),
            ),
            compiler_params=pltpu.CompilerParams(
                dimension_semantics=("parallel",),
                vmem_limit_bytes=_vmem_limit_bytes(blocks)),
        )(xt, hprev, wx, wh, b2)

    return out if Np == n_embd2 else out[:, :n_embd2]


# --------------------- fused time-loop (sequence) variant --------------------

def rnn_cell_seq_kernel(x_ref, h0_ref, wx_ref, wh_ref, b_ref, out_ref, h_scr):
    # Grid = (batch_block "parallel", time_block "arbitrary").
    @pl.when(pl.program_id(1) == 0)
    def _():
        # Re-seed the hidden-state carry for this batch tile.
        # TODO(synk): h0 is only read here; a one-shot DMA would free its
        # resident VMEM block for the remaining T-1 time blocks (minor).
        h_scr[...] = h0_ref[...].astype(jnp.float32)

    wx = wx_ref[...]
    wh = wh_ref[...]
    b = b_ref[...]
    tb = x_ref.shape[0]   # static timesteps per grid step

    def step(i, h):
        z = jnp.dot(x_ref[i].astype(_COMPUTE_DTYPE), wx,
                    preferred_element_type=jnp.float32)
        z = z + jnp.dot(h.astype(_COMPUTE_DTYPE), wh,
                        preferred_element_type=jnp.float32)
        z = z + b
        h_new = jnp.tanh(z)
        out_ref[i] = h_new.astype(out_ref.dtype)
        return h_new

    h_scr[...] = lax.fori_loop(0, tb, step, h_scr[...], unroll=True)


def rnn_cell_sequence(x_seq, h0, weight, bias):
    """Apply the cell over x_seq (T, B, n_embd) in ONE pallas_call.

    Weights/bias stay resident in VMEM (bf16) for the whole sequence; the
    hidden state is carried per batch tile in a VMEM scratch.  Returns all
    hidden states (T, B, n_embd2).
    """
    T, B, n_embd = x_seq.shape
    _, n_embd2 = h0.shape
    Np = _round_up(n_embd2, 128)

    wx = jnp.zeros((n_embd, Np), _COMPUTE_DTYPE).at[:, :n_embd2].set(
        weight[:, :n_embd].T.astype(_COMPUTE_DTYPE))
    # Pad both dims of Wh so the (always-zero) padded hidden lanes contribute nothing.
    wh = jnp.zeros((Np, Np), _COMPUTE_DTYPE).at[:n_embd2, :n_embd2].set(
        weight[:, n_embd:].T.astype(_COMPUTE_DTYPE))
    b2 = jnp.zeros((1, Np), jnp.float32).at[0, :n_embd2].set(bias.astype(jnp.float32))
    h0p = jnp.zeros((B, Np), h0.dtype).at[:, :n_embd2].set(h0)

    # Timesteps per grid step (amortizes per-step pipeline overhead).
    TB = next(t for t in (4, 2, 1) if T % t == 0)

    resident = n_embd * Np * 2 + Np * Np * 2 + Np * 4
    per_row = TB * n_embd * 4 + TB * Np * 4 + 2 * Np * 4   # x + out + h0/scratch
    bb = _pick_batch_block(B, per_row, resident)

    blocks = [TB * bb * n_embd * 4, bb * Np * 4, n_embd * Np * 2, Np * Np * 2,
              Np * 4, TB * bb * Np * 4, bb * Np * 4]

    out = pl.pallas_call(
        rnn_cell_seq_kernel,
        out_shape=jax.ShapeDtypeStruct((T, B, Np), x_seq.dtype),
        grid_spec=pltpu.PrefetchScalarGridSpec(
            num_scalar_prefetch=0,
            grid=(B // bb, T // TB),
            in_specs=[
                pl.BlockSpec((TB, bb, n_embd), lambda b, t: (t, b, 0)),  # x streamed
                pl.BlockSpec((bb, Np), lambda b, t: (b, 0)),             # h0 (per tile)
                pl.BlockSpec((n_embd, Np), lambda b, t: (0, 0)),         # Wx resident
                pl.BlockSpec((Np, Np), lambda b, t: (0, 0)),             # Wh resident
                pl.BlockSpec((1, Np), lambda b, t: (0, 0)),              # bias resident
            ],
            out_specs=pl.BlockSpec((TB, bb, Np), lambda b, t: (t, b, 0)),
            scratch_shapes=[pltpu.VMEM((bb, Np), jnp.float32)],          # hidden carry
        ),
        compiler_params=pltpu.CompilerParams(
            dimension_semantics=("parallel", "arbitrary"),
            vmem_limit_bytes=_vmem_limit_bytes(blocks)),
    )(x_seq, h0p, wx, wh, b2)
    return out if Np == n_embd2 else out[:, :, :n_embd2]


# --------------------------------- references --------------------------------

def rnn_cell_ref(xt, hprev, weight, bias):
    xh = jnp.concatenate([xt, hprev], axis=1)
    return jnp.tanh(xh @ weight.T + bias)


def rnn_cell_sequence_ref(x_seq, h0, weight, bias):
    def step(h, x):
        h_new = jnp.tanh(jnp.concatenate([x, h], axis=1) @ weight.T + bias)
        return h_new, h_new
    _, hs = jax.lax.scan(step, h0, x_seq)
    return hs


if __name__ == "__main__":
    B, n_embd, n_embd2, T = 8, 16, 32, 8

    key = jax.random.PRNGKey(0)
    k_x, k_h, k_w, k_b, k_s = jax.random.split(key, 5)

    xt = jax.random.normal(k_x, (B, n_embd), dtype=jnp.float32)
    hprev = jax.random.normal(k_h, (B, n_embd2), dtype=jnp.float32)

    # Deterministic init mimicking nn.Linear: U(-1/sqrt(fan_in), 1/sqrt(fan_in))
    fan_in = n_embd + n_embd2
    bound = 1.0 / (fan_in ** 0.5)
    weight = jax.random.uniform(k_w, (n_embd2, fan_in), jnp.float32, -bound, bound)
    bias = jax.random.uniform(k_b, (n_embd2,), jnp.float32, -bound, bound)

    # Single-step cell (matches the PyTorch module forward).
    ht = rnn_cell(xt, hprev, weight, bias)
    jax.block_until_ready(ht)
    ht_ref = rnn_cell_ref(xt, hprev, weight, bias)
    assert ht.shape == (B, n_embd2)
    # bf16 weights/activations with f32 accumulation -> slightly loosened tol.
    assert jnp.max(jnp.abs(ht - ht_ref)) < 2e-2

    # Fused sequence variant (cell stepped over T timesteps in one kernel).
    x_seq = jax.random.normal(k_s, (T, B, n_embd), dtype=jnp.float32)
    hs = rnn_cell_sequence(x_seq, hprev, weight, bias)
    jax.block_until_ready(hs)
    hs_ref = rnn_cell_sequence_ref(x_seq, hprev, weight, bias)
    assert hs.shape == (T, B, n_embd2)
    assert jnp.max(jnp.abs(hs - hs_ref)) < 2e-2

    print("KERNEL_OK")
</pallas_src>

<mosaic_0001>
module attributes {stable_mosaic.version = 11 : i64} {
  func.func @_cell_packed_kernel(%arg0: i32, %arg1: memref<8x48xf32, #tpu.memory_space<vmem>>, %arg2: memref<48x128xbf16, #tpu.memory_space<vmem>>, %arg3: memref<1x128xf32, #tpu.memory_space<vmem>>, %arg4: memref<8x128xf32, #tpu.memory_space<vmem>>) attributes {dimension_semantics = [#tpu.dimension_semantics<parallel>], iteration_bounds = array<i64: 1>, scalar_prefetch = 0 : i64, scratch_operands = 0 : i64, tpu.core_type = #tpu.core_type<tc>, window_params = [{transform_indices = @transform_0, window_bounds = array<i64: 8, 48>}, {pipeline_mode = #tpu.pipeline_mode<synchronous>, transform_indices = @transform_1, window_bounds = array<i64: 48, 128>}, {pipeline_mode = #tpu.pipeline_mode<synchronous>, transform_indices = @transform_2, window_bounds = array<i64: 1, 128>}, {transform_indices = @transform_3, window_bounds = array<i64: 8, 128>}]} {
    %c0 = arith.constant 0 : index
    %c0_0 = arith.constant 0 : index
    %0 = vector.load %arg1[%c0, %c0_0] : memref<8x48xf32, #tpu.memory_space<vmem>>, vector<8x48xf32>
    %1 = arith.truncf %0 : vector<8x48xf32> to vector<8x48xbf16>
    %c0_1 = arith.constant 0 : index
    %c0_2 = arith.constant 0 : index
    %2 = vector.load %arg2[%c0_1, %c0_2] : memref<48x128xbf16, #tpu.memory_space<vmem>>, vector<48x128xbf16>
    %cst = arith.constant dense<0.000000e+00> : vector<8x128xf32>
    %3 = tpu.matmul %1, %2, %cst {dimension_numbers = #tpu.dot_dimension_numbers<[1], [0], [0], [1], [0, 0, 1, 1], [], []>} : vector<8x48xbf16>, vector<48x128xbf16>, vector<8x128xf32> -> vector<8x128xf32>
    %c0_3 = arith.constant 0 : index
    %c0_4 = arith.constant 0 : index
    %4 = vector.load %arg3[%c0_3, %c0_4] : memref<1x128xf32, #tpu.memory_space<vmem>>, vector<1x128xf32>
    %5 = vector.broadcast %4 : vector<1x128xf32> to vector<8x128xf32>
    %6 = arith.addf %3, %5 : vector<8x128xf32>
    %7 = math.tanh %6 : vector<8x128xf32>
    %c0_5 = arith.constant 0 : index
    %c0_6 = arith.constant 0 : index
    %8 = vector.load %arg4[%c0_5, %c0_6] : memref<8x128xf32, #tpu.memory_space<vmem>>, vector<8x128xf32>
    tpu.vector_store %arg4[%c0_5, %c0_6], %7 {strides = array<i32>} : memref<8x128xf32, #tpu.memory_space<vmem>>, vector<8x128xf32>,
    return
  }
  func.func @transform_0(%arg0: i32) -> (i32, i32) {
    %c0_i32 = arith.constant 0 : i32
    %c0_i32_0 = arith.constant 0 : i32
    return %arg0, %c0_i32 : i32, i32
  }
  func.func @transform_1(%arg0: i32) -> (i32, i32) {
    %c0_i32 = arith.constant 0 : i32
    %c0_i32_0 = arith.constant 0 : i32
    %c0_i32_1 = arith.constant 0 : i32
    return %c0_i32, %c0_i32_0 : i32, i32
  }
  func.func @transform_2(%arg0: i32) -> (i32, i32) {
    %c0_i32 = arith.constant 0 : i32
    %c0_i32_0 = arith.constant 0 : i32
    %c0_i32_1 = arith.constant 0 : i32
    return %c0_i32, %c0_i32_0 : i32, i32
  }
  func.func @transform_3(%arg0: i32) -> (i32, i32) {
    %c0_i32 = arith.constant 0 : i32
    %c0_i32_0 = arith.constant 0 : i32
    return %arg0, %c0_i32 : i32, i32
  }
}

</mosaic_0001>

<llo_original>
// kernel: tpu_custom_call.1
$region0: #{tpu_custom_call.1}
  #allocation0 [shape = 'u32[]', space=smem, size = 0x4, offset = 0x4, fixed_abs, tag = 'smem constant byte address 0x4 - core index']
  #allocation1 [shape = 'u32[144,128]{1,0:T(1,128)}', space=vmem, size = 0x12000, scoped, tag = 'internal scratch']
  %s0 = inlined_call_operand.hbm [shape: f32[8,48], index: 0, kind: input, shape index: {}]
  %s1 = inlined_call_operand.hbm [shape: bf16[48,128], index: 1, kind: input, shape index: {}]
  %s2 = inlined_call_operand.vmem [shape: f32[1,128], index: 2, kind: input, shape index: {}]
  %s3 = inlined_call_operand.hbm [shape: f32[8,128], index: 3, kind: output, shape index: {}]
  %s4 = sld [smem:[#allocation0]]
  $region30: #{tpu_custom_call.1} parent=0
    _
  %s6 = ssub.s32 1, %s4
  %s7 = scalar_select 0, %s6, %s4
  $region1: #{tpu_custom_call.1} parent=0
    #allocation2 [shape = 'u8[4096]{0}', space=vmem, size = 0x1000, scoped, tag = 'input window, operand 0, single buffered']
    #allocation3 [shape = 's32[1]{0}', space=sflag, size = 0x4, scoped, tag = 'scoped memory for tpu_custom_call.1']
    #allocation4 [shape = 's32[1]{0}', space=sflag, size = 0x4, scoped, tag = 'scoped memory for tpu_custom_call.1']
    #allocation5 [shape = 'u8[12288]{0}', space=vmem, size = 0x3000, scoped, tag = 'input window, operand 1, single buffered']
    #allocation6 [shape = 's32[1]{0}', space=sflag, size = 0x4, scoped, tag = 'scoped memory for tpu_custom_call.1']
    #allocation7 [shape = 'u8[4096]{0}', space=vmem, size = 0x1000, scoped, tag = 'output window, operand 0, single buffered']
    %8 = vsyncpa [#allocation3], 0
    %9 = vsyncpa [#allocation6], 0
    %10 = vsyncpa [#allocation4], 0
    // Predicated region
    $region2: #{tpu_custom_call.1} parent=1 // pred_check
      _
    $region3: #{tpu_custom_call.1} parent=1 // pred_check_branch
      %12 = sbr.rel (0) target = $region5
    $region4: #{tpu_custom_call.1} parent=1 // pred_region
      %s14 = ssub.s32 128, 128
      %15 = vsyncadd [#allocation3], %s14
      %s17 = sshll.u32 [#allocation2], 4
      %s18 = int_to_ptr.vmem [resolvable:$true] %s17
      %20 = dma.hbm_to_vmem [thread:$0]  %s0, 128, %s18, [#allocation3]
    $region5: #{tpu_custom_call.1} parent=1 // pred_fallthru
      _
    // Predicated region
    $region6: #{tpu_custom_call.1} parent=1 // pred_check
      _
    $region7: #{tpu_custom_call.1} parent=1 // pred_check_branch
      %22 = sbr.rel (0) target = $region9
    $region8: #{tpu_custom_call.1} parent=1 // pred_region
      %s24 = ssub.s32 384, 384
      %25 = vsyncadd [#allocation6], %s24
      %s26 = sshll.u32 [#allocation5], 4
      %s27 = int_to_ptr.vmem [resolvable:$true] %s26
      %32 = dma.hbm_to_vmem [thread:$0]  %s1, 384, %s27, [#allocation6], 64, 64, 4
    $region9: #{tpu_custom_call.1} parent=1 // pred_fallthru
      _
    // Predicated region
    $region10: #{tpu_custom_call.1} parent=1 // pred_check
      _
    $region11: #{tpu_custom_call.1} parent=1 // pred_check_branch
      %34 = sbr.rel (0) target = $region13
    $region12: #{tpu_custom_call.1} parent=1 // pred_region
      _
    $region13: #{tpu_custom_call.1} parent=1 // pred_fallthru
      _
    // Predicated region
    $region14: #{tpu_custom_call.1} parent=1 // pred_check
      _
    $region15: #{tpu_custom_call.1} parent=1 // pred_check_branch
      %36 = sbr.rel (0) target = $region17
    $region16: #{tpu_custom_call.1} parent=1 // pred_region
      %37 = dma.done [#allocation3], 128
    $region17: #{tpu_custom_call.1} parent=1 // pred_fallthru
      _
    // Predicated region
    $region18: #{tpu_custom_call.1} parent=1 // pred_check
      _
    $region19: #{tpu_custom_call.1} parent=1 // pred_check_branch
      %39 = sbr.rel (0) target = $region21
    $region20: #{tpu_custom_call.1} parent=1 // pred_region
      %40 = dma.done [#allocation6], 384
    $region21: #{tpu_custom_call.1} parent=1 // pred_fallthru
      _
    %v42 = vld [vmem:[#allocation2] sm:$0xff]
    %v43 = vpack.c.bf16 %v42, %v42
    %v44 = vld [vmem:[#allocation5] sm:$0xf]
    %v45 = vld [vmem:[#allocation5 + $0x4] sm:$0xf]
    %v46 = vld [vmem:[#allocation5 + $0x8] sm:$0xf]
    %v47 = vld [vmem:[#allocation5 + $0xc] sm:$0xf]
    %v48 = vld [vmem:[#allocation5 + $0x10] sm:$0xf]
    %v49 = vld [vmem:[#allocation5 + $0x14] sm:$0xf]
    %v50 = vld [vmem:[%s2] sm:$0x1]
    %v52 = vlaneseq
    %v53 = vshrl.u32 %v52, 7
    %v54 = vsub.s32 0, %v53
    %v55 = vrot.slane %v50, %v54
    %v63 = vunpack.c.l.b16 %v44
    %v64 = vunpack.c.l.b16 %v45
    %v65 = vunpack.c.l.b16 %v46
    %v66 = vunpack.c.l.b16 %v47
    %v67 = vunpack.c.l.b16 %v48
    %v68 = vunpack.c.l.b16 %v49
    %v69 = vpack.c.b16 %v64, %v63
    %v70 = vpack.c.b16 %v66, %v65
    %v71 = vpack.c.b16 %v68, %v67
    %vm75 = vcmask 392192
    %v77 = vsel %vm75, %v43, 0
    %79 = vmatprep.subr.bf16.mxu0 0
    %80 = vmatpush1.bf16.msra.mxu0 %v69
    %81 = vmatprep.subr.bf16.mxu0 0
    %82 = vmatpush1.bf16.msra.mxu0 %v70
    %83 = vmatprep.subr.bf16.mxu0 0
    %84 = vmatpush1.bf16.msra.mxu0 %v71
    %85 = vmatprep.subr.bf16.mxu0 0
    %86 = vmatpush1.bf16.msra.mxu0 0
    %87 = vmatprep.subr.bf16.mxu0 0
    %88 = vmatpush1.bf16.msra.mxu0 0
    %89 = vmatprep.subr.bf16.mxu0 0
    %90 = vmatpush1.bf16.msra.mxu0 0
    %91 = vmatprep.subr.bf16.mxu0 0
    %92 = vmatpush1.bf16.msra.mxu0 0
    %93 = vmatprep.subr.bf16.mxu0 0
    %94 = vmatpush1.bf16.msra.mxu0 0
    %95 = vmatprep.subr.bf16.mxu0 0
    %96 = vmatpush1.bf16.msra.mxu0 0
    %97 = vmatprep.subr.bf16.mxu0 0
    %98 = vmatpush1.bf16.msra.mxu0 0
    %99 = vmatprep.subr.bf16.mxu0 0
    %100 = vmatpush1.bf16.msra.mxu0 0
    %101 = vmatprep.subr.bf16.mxu0 0
    %102 = vmatpush1.bf16.msra.mxu0 0
    %103 = vmatprep.subr.bf16.mxu0 0
    %104 = vmatpush1.bf16.msra.mxu0 0
    %105 = vmatprep.subr.bf16.mxu0 0
    %106 = vmatpush1.bf16.msra.mxu0 0
    %107 = vmatprep.subr.bf16.mxu0 0
    %108 = vmatpush1.bf16.msra.mxu0 0
    %109 = vmatprep.subr.bf16.mxu0 0
    %110 = vmatpush1.bf16.msra.mxu0 0
    %111 = vmatprep.mubr.bf16.mxu0 0
    %112 = vmatmul.mubr.bf16.gmra.mrb[0].mxu0 %v77
    %v113 = vpop.f32.mrb[0].mxu0
    %v114 = vadd.f32 %v55, %v113
    %v115 = vpop.f32.mrb[0].mxu0
    %v116 = vpop.f32.mrb[0].mxu0
    %v117 = vpop.f32.mrb[0].mxu0
    %118 = vdwg.mxu0
    %v119 = vtanh.pop %v114
    %120 = vst [vmem:[#allocation7] sm:$0xff] %v119
    // Predicated region
    $region22: #{tpu_custom_call.1} parent=1 // pred_check
      _
    $region23: #{tpu_custom_call.1} parent=1 // pred_check_branch
      %122 = sbr.rel (0) target = $region25
    $region24: #{tpu_custom_call.1} parent=1 // pred_region
      %s124 = ssub.s32 128, 128
      %125 = vsyncadd [#allocation4], %s124
      %s127 = sshll.u32 [#allocation7], 4
      %s128 = int_to_ptr.vmem [resolvable:$true] %s127
      %130 = dma.vmem_to_hbm [thread:$0]  %s128, 128, %s3, [#allocation4]
    $region25: #{tpu_custom_call.1} parent=1 // pred_fallthru
      _
    // Predicated region
    $region26: #{tpu_custom_call.1} parent=1 // pred_check
      _
    $region27: #{tpu_custom_call.1} parent=1 // pred_check_branch
      %132 = sbr.rel (0) target = $region29
    $region28: #{tpu_custom_call.1} parent=1 // pred_region
      %133 = dma.done [#allocation4], 128
    $region29: #{tpu_custom_call.1} parent=1 // pred_fallthru
      _
    %134 = vsyncpa [#allocation3], 1
    %135 = vsyncpa [#allocation6], 1
    %136 = vsyncpa [#allocation4], 1

</llo_original>
